<compile_context>
chip_gen: v5e
topology: v5e:2x2
jax: 0.10.0
libtpu: 0.0.40
codegen_flags: <defaults>
</compile_context>

<pallas_src>
import functools

import numpy as np
import jax
import jax.numpy as jnp
from jax import lax
from jax.experimental import pallas as pl
from jax.experimental.pallas import tpu as pltpu


_VMEM_LIMIT_BYTES = 32 * 1024 * 1024   # safe on v5e / v6e / v7x scoped VMEM


def _pick_tile(dim, target):
    """`target` (a multiple of 128) if it divides `dim`, else the full dim."""
    return target if dim % target == 0 else dim


def _mosaic_params(dims):
    return pltpu.CompilerParams(
        dimension_semantics=dims, vmem_limit_bytes=_VMEM_LIMIT_BYTES)


# ------------------------------------------------------------ linear kernel

def _linear_kernel(x_ref, w_ref, b_ref, o_ref, acc_ref):
    """One (tm, tn) output tile: acc += x(tm,tk) @ w(tk,tn); bias on last k."""
    k = pl.program_id(2)

    @pl.when(k == 0)
    def _():
        acc_ref[...] = jnp.zeros(acc_ref.shape, jnp.float32)

    acc_ref[...] += jnp.dot(x_ref[...], w_ref[...],
                            preferred_element_type=jnp.float32)

    @pl.when(k == pl.num_programs(2) - 1)
    def _():
        o_ref[...] = (acc_ref[...] + b_ref[...]).astype(o_ref.dtype)


def pallas_linear(x, w_t, b, out_dtype, *, tm=256, tn=256, tk=512):
    """y = x @ w_t + b, with w_t already laid out (K, M) (no in-kernel .T)."""
    N, K = x.shape
    Kw, M = w_t.shape
    assert K == Kw, (K, Kw)
    tm = _pick_tile(N, tm)
    tn = _pick_tile(M, tn)
    tk = _pick_tile(K, tk)
    grid = (N // tm, M // tn, K // tk)
    return pl.pallas_call(
        _linear_kernel,
        out_shape=jax.ShapeDtypeStruct((N, M), out_dtype),
        grid=grid,
        in_specs=[
            pl.BlockSpec((tm, tk), lambda i, j, k: (i, k)),
            pl.BlockSpec((tk, tn), lambda i, j, k: (k, j)),
            pl.BlockSpec((1, tn), lambda i, j, k: (0, j)),
        ],
        out_specs=pl.BlockSpec((tm, tn), lambda i, j, k: (i, j)),
        scratch_shapes=[pltpu.VMEM((tm, tn), jnp.float32)],
        compiler_params=_mosaic_params(("parallel", "parallel", "arbitrary")),
    )(x, w_t, b.reshape(1, M))


# --------------------------------------------------------- attention kernel

def _attn_core(q, k, v, bias, num_heads):
    """q (T,E), k/v (S,E) bf16; bias (H,T,S) f32 -> (T, E) f32 context."""
    T, E = q.shape
    hd = E // num_heads
    outs = []
    for h in range(num_heads):
        sl = slice(h * hd, (h + 1) * hd)
        qh, kh, vh = q[:, sl], k[:, sl], v[:, sl]
        # q @ k^T without materializing a transpose: contract last dims.
        s = lax.dot_general(qh, kh, (((1,), (1,)), ((), ())),
                            preferred_element_type=jnp.float32)
        s = s + bias[h]                               # RPE residual_attn
        m = jnp.max(s, axis=-1, keepdims=True)
        p = jnp.exp(s - m)
        l = jnp.sum(p, axis=-1, keepdims=True)
        p = p * pl.reciprocal(l, approx=True)         # EUP, no VALU divide
        outs.append(jnp.dot(p.astype(vh.dtype), vh,
                            preferred_element_type=jnp.float32))
    return jnp.concatenate(outs, axis=-1)             # (T, E), lane-dense


def _attn_fused_kernel(qkv_ref, bias_ref, o_ref, *, num_heads, embed_dim):
    E = embed_dim
    qkv = qkv_ref[...]
    ctx = _attn_core(qkv[:, :E], qkv[:, E:2 * E], qkv[:, 2 * E:],
                     bias_ref[...], num_heads)
    o_ref[...] = ctx.astype(o_ref.dtype)


def _attn_split_kernel(q_ref, k_ref, v_ref, bias_ref, o_ref, *, num_heads):
    ctx = _attn_core(q_ref[...], k_ref[...], v_ref[...], bias_ref[...],
                     num_heads)
    o_ref[...] = ctx.astype(o_ref.dtype)


def pallas_attention_fused(qkv, rpe_bias, num_heads, out_dtype):
    # qkv: (B, T, 3E) from the fused QKV projection (self-attention, S == T).
    B, T, threeE = qkv.shape
    E = threeE // 3
    H, _, S = rpe_bias.shape
    return pl.pallas_call(
        functools.partial(_attn_fused_kernel, num_heads=num_heads,
                          embed_dim=E),
        out_shape=jax.ShapeDtypeStruct((B, T, E), out_dtype),
        grid=(B,),
        in_specs=[
            pl.BlockSpec((None, T, threeE), lambda b: (b, 0, 0)),
            # constant block index -> bias tile stays resident in VMEM
            pl.BlockSpec((H, T, S), lambda b: (0, 0, 0)),
        ],
        out_specs=pl.BlockSpec((None, T, E), lambda b: (b, 0, 0)),
        compiler_params=_mosaic_params(("parallel",)),
    )(qkv, rpe_bias)


def pallas_attention_split(q, k, v, rpe_bias, num_heads, out_dtype):
    # q: (B, T, E), k/v: (B, S, E)  -- general (distinct q/k/v) path.
    B, T, E = q.shape
    S = k.shape[1]
    H = num_heads
    return pl.pallas_call(
        functools.partial(_attn_split_kernel, num_heads=num_heads),
        out_shape=jax.ShapeDtypeStruct((B, T, E), out_dtype),
        grid=(B,),
        in_specs=[
            pl.BlockSpec((None, T, E), lambda b: (b, 0, 0)),
            pl.BlockSpec((None, S, E), lambda b: (b, 0, 0)),
            pl.BlockSpec((None, S, E), lambda b: (b, 0, 0)),
            pl.BlockSpec((H, T, S), lambda b: (0, 0, 0)),
        ],
        out_specs=pl.BlockSpec((None, T, E), lambda b: (b, 0, 0)),
        compiler_params=_mosaic_params(("parallel",)),
    )(q, k, v, rpe_bias)


# ------------------------------------------------------------------ RPE glue

def _get_coord(h, w):
    coords = np.stack(np.meshgrid(np.arange(h), np.arange(w), indexing="ij"))
    return coords.reshape(2, -1)


def _relative_position_index(q_shape, kv_window_size):
    cq = _get_coord(q_shape[0], q_shape[1])
    ckv = _get_coord(kv_window_size, kv_window_size)
    rel = cq[:, :, None] - ckv[:, None, :]             # (2, T, S)
    rel = rel.transpose(1, 2, 0).astype(np.int64)      # (T, S, 2)
    rel[:, :, 0] += kv_window_size - 1
    rel[:, :, 1] += kv_window_size - 1
    rel[:, :, 0] *= q_shape[1] + kv_window_size - 1
    return rel.sum(-1)                                  # (T, S)


def rpe_bias_from_table(table, q_shape, kv_window_size, num_heads):
    # TODO(synk): general q_shape requires a bicubic `resize` of the bias
    # table; here q_shape == (q_window, q_window) so the resize is the
    # identity and we gather directly from the table.
    idx = _relative_position_index(q_shape, kv_window_size)      # (T, S)
    T, S = idx.shape
    rpb = table[idx.reshape(-1)].reshape(T, S, num_heads)
    return jnp.transpose(rpb, (2, 0, 1))                          # (H, T, S)


# ------------------------------------------------------ module (params + fwd)

class MultiheadAttentionPallas:
    def __init__(self, embed_dim, num_heads, q_window_size, kv_window_size,
                 rng, compute_dtype=jnp.bfloat16):
        assert embed_dim % num_heads == 0
        self.embed_dim = embed_dim
        self.num_heads = num_heads
        self.head_dim = embed_dim // num_heads
        self.q_window_size = q_window_size
        self.kv_window_size = kv_window_size
        self.compute_dtype = compute_dtype

        ks = jax.random.split(rng, 9)
        E = embed_dim
        init = lambda k, s: (jax.random.normal(k, s, jnp.float32) * 0.1)
        # master (f32) parameters, nn.Linear layout (out_features, in_features)
        self.Wq, self.bq = init(ks[0], (E, E)), init(ks[1], (E,))
        self.Wk, self.bk = init(ks[2], (E, E)), init(ks[3], (E,))
        self.Wv, self.bv = init(ks[4], (E, E)), init(ks[5], (E,))
        self.Wo, self.bo = init(ks[6], (E, E)), init(ks[7], (E,))
        n_rel = (q_window_size + kv_window_size - 1) ** 2
        self.rpe_table = 0.02 * jax.random.truncated_normal(
            ks[8], -2.0, 2.0, (n_rel, num_heads), jnp.float32)

        # ---- kernel-side parameters, prepared once at init ---------------
        scaling = float(self.head_dim) ** -0.5
        cd = compute_dtype
        # pre-transposed (K, M) weights; q-scaling baked into Wq/bq.
        self.Wq_t = (self.Wq * scaling).T.astype(cd)
        self.Wk_t = self.Wk.T.astype(cd)
        self.Wv_t = self.Wv.T.astype(cd)
        self.Wo_t = self.Wo.T.astype(cd)
        self.bq_s = self.bq * scaling
        # fused QKV weight (E, 3E) / bias (3E,)
        self.Wqkv_t = jnp.concatenate([self.Wq_t, self.Wk_t, self.Wv_t], axis=1)
        self.b_qkv = jnp.concatenate([self.bq_s, self.bk, self.bv])
        # RPE bias precomputed once for the canonical q_shape (== window).
        self.rpe_bias = rpe_bias_from_table(
            self.rpe_table, (q_window_size, q_window_size), kv_window_size,
            num_heads)                                            # (H, T, S)

    def _bias(self, q_shape):
        if tuple(q_shape) == (self.q_window_size, self.q_window_size):
            return self.rpe_bias
        return rpe_bias_from_table(self.rpe_table, q_shape,
                                   self.kv_window_size, self.num_heads)

    def __call__(self, query, key, value, q_shape):
        T, B, E = query.shape
        S = key.shape[0]
        H = self.num_heads
        cd = self.compute_dtype
        bias = self._bias(q_shape)

        # (T, B, E) -> batch-major tokens (B*T, E); this and its inverse at
        # the end are the only layout transposes in the whole forward.
        xq = jnp.transpose(query, (1, 0, 2)).reshape(B * T, E).astype(cd)

        if key is query and value is query:
            # fused QKV projection: one tiled matmul, activations read once.
            qkv = pallas_linear(xq, self.Wqkv_t, self.b_qkv, cd)   # (B*T, 3E)
            ctx = pallas_attention_fused(qkv.reshape(B, T, 3 * E), bias, H, cd)
        else:
            # general path with distinct query/key/value tensors.
            # TODO(synk): fuse the K and V projections into one (E, 2E) matmul
            # when `key is value`.
            xk = jnp.transpose(key, (1, 0, 2)).reshape(B * S, E).astype(cd)
            xv = jnp.transpose(value, (1, 0, 2)).reshape(B * S, E).astype(cd)
            q = pallas_linear(xq, self.Wq_t, self.bq_s, cd).reshape(B, T, E)
            k = pallas_linear(xk, self.Wk_t, self.bk, cd).reshape(B, S, E)
            v = pallas_linear(xv, self.Wv_t, self.bv, cd).reshape(B, S, E)
            ctx = pallas_attention_split(q, k, v, bias, H, cd)     # (B, T, E)

        out = pallas_linear(ctx.reshape(B * T, E), self.Wo_t, self.bo,
                            jnp.float32)                           # (B*T, E)
        return jnp.transpose(out.reshape(B, T, E), (1, 0, 2))      # (T, B, E)


# ----------------------------------------------------------------- reference

def reference_forward(m, query, key, value, q_shape):
    T, B, E = query.shape
    S = key.shape[0]
    H, hd = m.num_heads, m.head_dim
    scaling = float(hd) ** -0.5
    q = (query @ m.Wq.T + m.bq) * scaling
    k = key @ m.Wk.T + m.bk
    v = value @ m.Wv.T + m.bv
    qh = q.reshape(T, B, H, hd).transpose(1, 2, 0, 3)
    kh = k.reshape(S, B, H, hd).transpose(1, 2, 0, 3)
    vh = v.reshape(S, B, H, hd).transpose(1, 2, 0, 3)
    bias = rpe_bias_from_table(m.rpe_table, q_shape, m.kv_window_size, H)
    s = jnp.einsum("bhtd,bhsd->bhts", qh, kh) + bias[None]
    p = jax.nn.softmax(s, axis=-1)
    ctx = jnp.einsum("bhts,bhsd->bhtd", p, vh)
    out = ctx.transpose(2, 0, 1, 3).reshape(T, B, E) @ m.Wo.T + m.bo
    return out


# ----------------------------------------------------------------------- main

if __name__ == "__main__":
    embed_dim = 32
    num_heads = 4
    q_window = 4
    kv_window = 4
    T = q_window * q_window          # tgt_len = 16
    S = kv_window * kv_window        # src_len = 16
    B = 2                            # batch

    root = jax.random.PRNGKey(0)
    k_params, k_x, k_q, k_k, k_v = jax.random.split(root, 5)

    mha = MultiheadAttentionPallas(embed_dim, num_heads, q_window, kv_window,
                                   k_params)

    # --- self-attention: exercises the fused QKV projection fast path -----
    x = jax.random.normal(k_x, (T, B, embed_dim), jnp.float32)
    out = jax.block_until_ready(mha(x, x, x, q_shape=(q_window, q_window)))
    assert out.shape == (T, B, embed_dim), out.shape
    assert bool(jnp.all(jnp.isfinite(out)))
    ref = reference_forward(mha, x, x, x, (q_window, q_window))
    np.testing.assert_allclose(np.asarray(out), np.asarray(ref),
                               rtol=5e-2, atol=5e-2)

    # --- distinct query / key / value: general path ------------------------
    query = jax.random.normal(k_q, (T, B, embed_dim), jnp.float32)
    key = jax.random.normal(k_k, (S, B, embed_dim), jnp.float32)
    value = jax.random.normal(k_v, (S, B, embed_dim), jnp.float32)
    out2 = jax.block_until_ready(mha(query, key, value, (q_window, q_window)))
    assert out2.shape == (T, B, embed_dim), out2.shape
    assert bool(jnp.all(jnp.isfinite(out2)))
    ref2 = reference_forward(mha, query, key, value, (q_window, q_window))
    np.testing.assert_allclose(np.asarray(out2), np.asarray(ref2),
                               rtol=5e-2, atol=5e-2)

    print("KERNEL_OK")
</pallas_src>

<mosaic_0001>
module attributes {stable_mosaic.version = 11 : i64} {
  func.func @_linear_kernel(%arg0: i32, %arg1: i32, %arg2: i32, %arg3: memref<32x32xbf16, #tpu.memory_space<vmem>>, %arg4: memref<32x96xbf16, #tpu.memory_space<vmem>>, %arg5: memref<1x96xf32, #tpu.memory_space<vmem>>, %arg6: memref<32x96xbf16, #tpu.memory_space<vmem>>, %arg7: memref<32x96xf32, #tpu.memory_space<vmem>>) attributes {dimension_semantics = [#tpu.dimension_semantics<parallel>, #tpu.dimension_semantics<parallel>, #tpu.dimension_semantics<arbitrary>], iteration_bounds = array<i64: 1, 1, 1>, scalar_prefetch = 0 : i64, scratch_operands = 1 : i64, tpu.core_type = #tpu.core_type<tc>, window_params = [{transform_indices = @transform_0, window_bounds = array<i64: 32, 32>}, {transform_indices = @transform_1, window_bounds = array<i64: 32, 96>}, {transform_indices = @transform_2, window_bounds = array<i64: 1, 96>}, {transform_indices = @transform_3, window_bounds = array<i64: 32, 96>}]} {
    %c0_i32 = arith.constant 0 : i32
    %0 = arith.cmpi eq, %arg2, %c0_i32 : i32
    %1 = arith.extui %0 : i1 to i32
    %c0_i32_0 = arith.constant 0 : i32
    %2 = arith.cmpi ne, %1, %c0_i32_0 : i32
    scf.if %2 {
      %cst_10 = arith.constant 0.000000e+00 : f32
      %12 = vector.broadcast %cst_10 : f32 to vector<32x96xf32>
      %c0_11 = arith.constant 0 : index
      %c0_12 = arith.constant 0 : index
      %13 = vector.load %arg7[%c0_11, %c0_12] : memref<32x96xf32, #tpu.memory_space<vmem>>, vector<32x96xf32>
      tpu.vector_store %arg7[%c0_11, %c0_12], %12 {strides = array<i32>} : memref<32x96xf32, #tpu.memory_space<vmem>>, vector<32x96xf32>,
    } else {
    }
    %c0 = arith.constant 0 : index
    %c0_1 = arith.constant 0 : index
    %3 = vector.load %arg7[%c0, %c0_1] : memref<32x96xf32, #tpu.memory_space<vmem>>, vector<32x96xf32>
    %c0_2 = arith.constant 0 : index
    %c0_3 = arith.constant 0 : index
    %4 = vector.load %arg3[%c0_2, %c0_3] : memref<32x32xbf16, #tpu.memory_space<vmem>>, vector<32x32xbf16>
    %c0_4 = arith.constant 0 : index
    %c0_5 = arith.constant 0 : index
    %5 = vector.load %arg4[%c0_4, %c0_5] : memref<32x96xbf16, #tpu.memory_space<vmem>>, vector<32x96xbf16>
    %cst = arith.constant dense<0.000000e+00> : vector<32x96xf32>
    %6 = tpu.matmul %4, %5, %cst {dimension_numbers = #tpu.dot_dimension_numbers<[1], [0], [0], [1], [0, 0, 1, 1], [], []>} : vector<32x32xbf16>, vector<32x96xbf16>, vector<32x96xf32> -> vector<32x96xf32>
    %7 = arith.addf %3, %6 : vector<32x96xf32>
    %c0_6 = arith.constant 0 : index
    %c0_7 = arith.constant 0 : index
    %8 = vector.load %arg7[%c0_6, %c0_7] : memref<32x96xf32, #tpu.memory_space<vmem>>, vector<32x96xf32>
    tpu.vector_store %arg7[%c0_6, %c0_7], %7 {strides = array<i32>} : memref<32x96xf32, #tpu.memory_space<vmem>>, vector<32x96xf32>,
    %c0_i32_8 = arith.constant 0 : i32
    %9 = arith.cmpi eq, %arg2, %c0_i32_8 : i32
    %10 = arith.extui %9 : i1 to i32
    %c0_i32_9 = arith.constant 0 : i32
    %11 = arith.cmpi ne, %10, %c0_i32_9 : i32
    scf.if %11 {
      %c0_10 = arith.constant 0 : index
      %c0_11 = arith.constant 0 : index
      %12 = vector.load %arg7[%c0_10, %c0_11] : memref<32x96xf32, #tpu.memory_space<vmem>>, vector<32x96xf32>
      %c0_12 = arith.constant 0 : index
      %c0_13 = arith.constant 0 : index
      %13 = vector.load %arg5[%c0_12, %c0_13] : memref<1x96xf32, #tpu.memory_space<vmem>>, vector<1x96xf32>
      %14 = vector.broadcast %13 : vector<1x96xf32> to vector<32x96xf32>
      %15 = arith.addf %12, %14 : vector<32x96xf32>
      %16 = arith.truncf %15 : vector<32x96xf32> to vector<32x96xbf16>
      %c0_14 = arith.constant 0 : index
      %c0_15 = arith.constant 0 : index
      %17 = vector.load %arg6[%c0_14, %c0_15] : memref<32x96xbf16, #tpu.memory_space<vmem>>, vector<32x96xbf16>
      tpu.vector_store %arg6[%c0_14, %c0_15], %16 {strides = array<i32>} : memref<32x96xbf16, #tpu.memory_space<vmem>>, vector<32x96xbf16>,
    } else {
    }
    return
  }
  func.func @transform_0(%arg0: i32, %arg1: i32, %arg2: i32) -> (i32, i32) {
    %c0_i32 = arith.constant 0 : i32
    return %arg0, %arg2 : i32, i32
  }
  func.func @transform_1(%arg0: i32, %arg1: i32, %arg2: i32) -> (i32, i32) {
    %c0_i32 = arith.constant 0 : i32
    return %arg2, %arg1 : i32, i32
  }
  func.func @transform_2(%arg0: i32, %arg1: i32, %arg2: i32) -> (i32, i32) {
    %c0_i32 = arith.constant 0 : i32
    %c0_i32_0 = arith.constant 0 : i32
    return %c0_i32, %arg1 : i32, i32
  }
  func.func @transform_3(%arg0: i32, %arg1: i32, %arg2: i32) -> (i32, i32) {
    %c0_i32 = arith.constant 0 : i32
    return %arg0, %arg1 : i32, i32
  }
}

</mosaic_0001>

<llo_original>
// kernel: tpu_custom_call.1
$region0: #{tpu_custom_call.1}
  #allocation0 [shape = 'u32[]', space=smem, size = 0x4, offset = 0x4, fixed_abs, tag = 'smem constant byte address 0x4 - core index']
  #allocation1 [shape = 'u32[72,128]{1,0:T(1,128)}', space=vmem, size = 0x9000, scoped, tag = 'internal scratch']
  #allocation2 [shape = 'f32[32,96]{1,0:T(8,128)}', space=vmem, size = 0x4000, scoped, tag = 'scratch operand']
  %s0 = inlined_call_operand.hbm [shape: bf16[32,32], index: 0, kind: input, shape index: {}]
  %s1 = inlined_call_operand.hbm [shape: bf16[32,96], index: 1, kind: input, shape index: {}]
  %s2 = inlined_call_operand.vmem [shape: f32[1,96], index: 2, kind: input, shape index: {}]
  %s3 = inlined_call_operand.hbm [shape: bf16[32,96], index: 3, kind: output, shape index: {}]
  %s4 = sld [smem:[#allocation0]]
  $region38: #{tpu_custom_call.1} parent=0
    _
  %s6 = ssub.s32 1, %s4
  %s7 = scalar_select 0, %s6, %s4
  $region1: #{tpu_custom_call.1} parent=0
    #allocation3 [shape = 'u8[8192]{0}', space=vmem, size = 0x2000, scoped, tag = 'input window, operand 0, single buffered']
    #allocation4 [shape = 's32[1]{0}', space=sflag, size = 0x4, scoped, tag = 'scoped memory for tpu_custom_call.1']
    #allocation5 [shape = 's32[1]{0}', space=sflag, size = 0x4, scoped, tag = 'scoped memory for tpu_custom_call.1']
    #allocation6 [shape = 'u8[8192]{0}', space=vmem, size = 0x2000, scoped, tag = 'input window, operand 1, single buffered']
    #allocation7 [shape = 's32[1]{0}', space=sflag, size = 0x4, scoped, tag = 'scoped memory for tpu_custom_call.1']
    #allocation8 [shape = 'u8[8192]{0}', space=vmem, size = 0x2000, scoped, tag = 'output window, operand 0, single buffered']
    %8 = vsyncpa [#allocation4], 0
    %9 = vsyncpa [#allocation7], 0
    %10 = vsyncpa [#allocation5], 0
    // Predicated region
    $region2: #{tpu_custom_call.1} parent=1 // pred_check
      _
    $region3: #{tpu_custom_call.1} parent=1 // pred_check_branch
      %12 = sbr.rel (0) target = $region5
    $region4: #{tpu_custom_call.1} parent=1 // pred_region
      %14 = vsyncadd [#allocation4], 0
      %s15 = sshll.u32 %s0, 4
      %s16 = int_to_ptr.hbm [resolvable:$true] %s15
      %s17 = sshll.u32 [#allocation3], 4
      %s18 = int_to_ptr.vmem [resolvable:$true] %s17
      %23 = dma.hbm_to_vmem [thread:$0]  %s16, 256, %s18, [#allocation4], 64, 64, 4
    $region5: #{tpu_custom_call.1} parent=1 // pred_fallthru
      _
    // Predicated region
    $region6: #{tpu_custom_call.1} parent=1 // pred_check
      _
    $region7: #{tpu_custom_call.1} parent=1 // pred_check_branch
      %25 = sbr.rel (0) target = $region9
    $region8: #{tpu_custom_call.1} parent=1 // pred_region
      %27 = vsyncadd [#allocation7], 0
      %s28 = sshll.u32 %s1, 4
      %s29 = int_to_ptr.hbm [resolvable:$true] %s28
      %s30 = sshll.u32 [#allocation6], 4
      %s31 = int_to_ptr.vmem [resolvable:$true] %s30
      %36 = dma.hbm_to_vmem [thread:$0]  %s29, 256, %s31, [#allocation7], 64, 64, 4
    $region9: #{tpu_custom_call.1} parent=1 // pred_fallthru
      _
    // Predicated region
    $region10: #{tpu_custom_call.1} parent=1 // pred_check
      _
    $region11: #{tpu_custom_call.1} parent=1 // pred_check_branch
      %38 = sbr.rel (0) target = $region13
    $region12: #{tpu_custom_call.1} parent=1 // pred_region
      _
    $region13: #{tpu_custom_call.1} parent=1 // pred_fallthru
      _
    // Predicated region
    $region14: #{tpu_custom_call.1} parent=1 // pred_check
      _
    $region15: #{tpu_custom_call.1} parent=1 // pred_check_branch
      %40 = sbr.rel (0) target = $region17
    $region16: #{tpu_custom_call.1} parent=1 // pred_region
      %42 = dma.done [#allocation4], 256
    $region17: #{tpu_custom_call.1} parent=1 // pred_fallthru
      _
    // Predicated region
    $region18: #{tpu_custom_call.1} parent=1 // pred_check
      _
    $region19: #{tpu_custom_call.1} parent=1 // pred_check_branch
      %44 = sbr.rel (0) target = $region21
    $region20: #{tpu_custom_call.1} parent=1 // pred_region
      %46 = dma.done [#allocation7], 256
    $region21: #{tpu_custom_call.1} parent=1 // pred_fallthru
      _
    %p48 = scmp.eq.s32.totalorder 0, 0
    // Predicated region
    $region22: #{tpu_custom_call.1} parent=1 // pred_check
      %p49 = pneg %p48
    $region23: #{tpu_custom_call.1} parent=1 // pred_check_branch
      %51 = sbr.rel (%p49) target = $region25
    $region24: #{tpu_custom_call.1} parent=1 // pred_region
      %vm52 = vcmask 785408
      %53 = vst.msk [vmem:[#allocation2] sm:$0xff] %vm52, 0.0
      %54 = vst.msk [vmem:[#allocation2 + $0x8] sm:$0xff] %vm52, 0.0
      %55 = vst.msk [vmem:[#allocation2 + $0x10] sm:$0xff] %vm52, 0.0
      %56 = vst.msk [vmem:[#allocation2 + $0x18] sm:$0xff] %vm52, 0.0
    $region25: #{tpu_custom_call.1} parent=1 // pred_fallthru
      _
    %v57 = vld [vmem:[#allocation2] sm:$0xff]
    %v58 = vld [vmem:[#allocation2 + $0x8] sm:$0xff]
    %v59 = vld [vmem:[#allocation2 + $0x10] sm:$0xff]
    %v60 = vld [vmem:[#allocation2 + $0x18] sm:$0xff]
    %v61 = vld [vmem:[#allocation3] sm:$0xf]
    %v62 = vld [vmem:[#allocation3 + $0x4] sm:$0xf]
    %v63 = vld [vmem:[#allocation3 + $0x8] sm:$0xf]
    %v64 = vld [vmem:[#allocation3 + $0xc] sm:$0xf]
    %v65 = vld [vmem:[#allocation6] sm:$0xf]
    %v66 = vld [vmem:[#allocation6 + $0x4] sm:$0xf]
    %v67 = vld [vmem:[#allocation6 + $0x8] sm:$0xf]
    %v68 = vld [vmem:[#allocation6 + $0xc] sm:$0xf]
    %v73 = vunpack.c.l.b16 %v61
    %v74 = vunpack.c.l.b16 %v62
    %v75 = vunpack.c.l.b16 %v63
    %v76 = vunpack.c.l.b16 %v64
    %v77 = vpack.c.b16 %v74, %v73
    %v78 = vpack.c.b16 %v76, %v75
    %v83 = vunpack.c.l.b16 %v65
    %v84 = vunpack.c.l.b16 %v66
    %v85 = vunpack.c.l.b16 %v67
    %v86 = vunpack.c.l.b16 %v68
    %v87 = vpack.c.b16 %v84, %v83
    %v88 = vpack.c.b16 %v86, %v85
    %vm91 = vcmask 261120
    %v93 = vsel %vm91, %v77, 0
    %v96 = vsel %vm91, %v78, 0
    %98 = vmatpush.bf16.msra.mxu0 0
    %99 = vmatpush.bf16.msra.mxu0 0
    %100 = vmatpush.bf16.msra.mxu0 0
    %101 = vmatpush.bf16.msra.mxu0 0
    %102 = vmatpush.bf16.msra.mxu0 0
    %103 = vmatpush.bf16.msra.mxu0 0
    %104 = vmatpush.bf16.msra.mxu0 %v88
    %105 = vmatpush.bf16.msra.mxu0 %v87
    %106 = vmatmul.bf16.gmra.mxu0 %v93
    %v107 = vpop.f32.mrf.mxu0
    %v108 = vadd.f32 0.0, %v107
    %v109 = vpop.f32.mrf.mxu0
    %v110 = vadd.f32 0.0, %v109
    %111 = vmatmul.bf16.gmra.mxu0 %v96
    %v112 = vpop.f32.mrf.mxu0
    %v113 = vadd.f32 0.0, %v112
    %v114 = vpop.f32.mrf.mxu0
    %v115 = vadd.f32 0.0, %v114
    %116 = vdwg.mxu0
    %v117 = vadd.f32 %v57, %v108
    %v118 = vadd.f32 %v58, %v110
    %v119 = vadd.f32 %v59, %v113
    %v120 = vadd.f32 %v60, %v115
    %vm121 = vcmask 785408
    %122 = vst.msk [vmem:[#allocation2] sm:$0xff] %vm121, %v117
    %123 = vst.msk [vmem:[#allocation2 + $0x8] sm:$0xff] %vm121, %v118
    %124 = vst.msk [vmem:[#allocation2 + $0x10] sm:$0xff] %vm121, %v119
    %125 = vst.msk [vmem:[#allocation2 + $0x18] sm:$0xff] %vm121, %v120
    // Predicated region
    $region26: #{tpu_custom_call.1} parent=1 // pred_check
      %p126 = pneg %p48
    $region27: #{tpu_custom_call.1} parent=1 // pred_check_branch
      %128 = sbr.rel (%p126) target = $region29
    $region28: #{tpu_custom_call.1} parent=1 // pred_region
      %v129 = vld [vmem:[#allocation2] sm:$0xff]
      %v130 = vld [vmem:[#allocation2 + $0x8] sm:$0xff]
      %v131 = vld [vmem:[#allocation2 + $0x10] sm:$0xff]
      %v132 = vld [vmem:[#allocation2 + $0x18] sm:$0xff]
      %v133 = vld [vmem:[%s2] sm:$0x1]
      %v135 = vperm.slane %v133, 0
      %v137 = vadd.f32 %v129, %v135
      %v138 = vadd.f32 %v130, %v135
      %v139 = vadd.f32 %v131, %v135
      %v140 = vadd.f32 %v132, %v135
      %v141 = vpack.c.bf16 %v137, %v137
      %v142 = vpack.c.bf16 %v138, %v138
      %v143 = vpack.c.bf16 %v139, %v139
      %v144 = vpack.c.bf16 %v140, %v140
      %vm145 = vcmask 781312
      %146 = vst.msk [vmem:[#allocation8] sm:$0xf] %vm145, %v141
      %147 = vst.msk [vmem:[#allocation8 + $0x4] sm:$0xf] %vm145, %v142
      %148 = vst.msk [vmem:[#allocation8 + $0x8] sm:$0xf] %vm145, %v143
      %149 = vst.msk [vmem:[#allocation8 + $0xc] sm:$0xf] %vm145, %v144
    $region29: #{tpu_custom_call.1} parent=1 // pred_fallthru
      _
    // Predicated region
    $region30: #{tpu_custom_call.1} parent=1 // pred_check
      _
    $region31: #{tpu_custom_call.1} parent=1 // pred_check_branch
      %151 = sbr.rel (0) target = $region33
    $region32: #{tpu_custom_call.1} parent=1 // pred_region
      %153 = vsyncadd [#allocation5], 0
      %s154 = sshll.u32 [#allocation8], 4
      %s155 = int_to_ptr.vmem [resolvable:$true] %s154
      %s156 = sshll.u32 %s3, 4
      %s157 = int_to_ptr.hbm [resolvable:$true] %s156
      %162 = dma.vmem_to_hbm [thread:$0]  %s155, 256, %s157, [#allocation5], 64, 64, 4
    $region33: #{tpu_custom_call.1} parent=1 // pred_fallthru
      _
    // Predicated region
    $region34: #{tpu_custom_call.1} parent=1 // pred_check
      _
    $region35: #{tpu_custom_call.1} parent=1 // pred_check_branch
      %164 = sbr.rel (0) target = $region37
    $region36: #{tpu_custom_call.1} parent=1 // pred_region
      %166 = dma.done [#allocation5], 256
    $region37: #{tpu_custom_call.1} parent=1 // pred_fallthru
      _
    %167 = vsyncpa [#allocation4], 1
    %168 = vsyncpa [#allocation7], 1
    %169 = vsyncpa [#allocation5], 1

</llo_original>
